<compile_context>
chip_gen: v7x
topology: tpu7x:2x2x1
jax: 0.10.0
libtpu: 0.0.40
codegen_flags: <defaults>
</compile_context>

<pallas_src>
import jax
import jax.numpy as jnp
from jax.experimental import pallas as pl
from jax.experimental.pallas import tpu as pltpu

LANE = 128  # TPU vreg lane width


def _round_up(x, m):
    return (x + m - 1) // m * m


def _num_tensorcores():
    """2 TensorCores per chip on v7x, 1 on v5e/v6e."""
    try:
        kind = jax.devices()[0].device_kind.lower()
    except Exception:
        return 1
    return 2 if "v7" in kind else 1


def _make_dqn_kernel(n_obs, hidden, n_actions, n_pad):
    fma_layer1 = n_obs <= 8  # tiny K: VPU broadcast-FMAs beat a 4/128 MXU pass

    def kernel(x_ref, w1_ref, w2_ref, w3_ref, b_ref, q_ref, act_ref):
        # Biases live in one resident (1, 2*hidden + n_pad) f32 buffer.
        b1 = b_ref[:, 0:hidden]
        b2 = b_ref[:, hidden:2 * hidden]
        b3 = b_ref[:, 2 * hidden:2 * hidden + n_pad]

        x = x_ref[...].astype(jnp.float32)               # (tile_b, n_obs) f32

        # ---- layer 1 ----
        if fma_layer1:
            w1 = w1_ref[...]                             # (n_obs, hidden) f32
            h1 = x[:, 0:1] * w1[0:1, :]
            for k in range(1, n_obs):
                h1 = h1 + x[:, k:k + 1] * w1[k:k + 1, :]
            h1 = h1 + b1
        else:
            h1 = jnp.dot(x, w1_ref[...].astype(jnp.float32),
                         preferred_element_type=jnp.float32) + b1
        h1 = jnp.maximum(h1, 0.0).astype(w2_ref.dtype)   # downcast matmul input only

        # ---- layer 2 (MXU, f32 accumulation; bias+ReLU stay f32 on the VPU) ----
        h2 = jnp.dot(h1, w2_ref[...], preferred_element_type=jnp.float32) + b2
        h2 = jnp.maximum(h2, 0.0).astype(w3_ref.dtype)

        # ---- layer 3 (MXU, lane-padded weights) ----
        q = jnp.dot(h2, w3_ref[...], preferred_element_type=jnp.float32) + b3

        # Fused epilogue: store only the valid action columns ...
        q_ref[...] = q[:, :n_actions].astype(q_ref.dtype)

        # ... and the greedy action per row (first max index over valid lanes).
        col = jax.lax.broadcasted_iota(jnp.int32, q.shape, 1)
        qm = jnp.where(col < n_actions, q, -jnp.inf)
        row_max = jnp.max(qm, axis=-1, keepdims=True)
        act = jnp.min(jnp.where(qm == row_max, col, n_pad), axis=-1, keepdims=True)
        act_ref[...] = act.astype(jnp.int32)

    return kernel


def prepare_dqn_params(params, *, use_bf16=True):
    """One-time packing (do this at init / target-network sync, NOT per call):
    pad layer 3 to 128 output lanes, concatenate biases into one buffer, and
    cast the two 128-wide weight matrices to the compute dtype."""
    w1, b1 = params["w1"], params["b1"]
    w2, b2 = params["w2"], params["b2"]
    w3, b3 = params["w3"], params["b3"]
    n_obs, hidden = w1.shape
    n_actions = w3.shape[1]
    n_pad = _round_up(n_actions, LANE)
    if n_pad != n_actions:
        w3 = jnp.pad(w3, ((0, 0), (0, n_pad - n_actions)))
        b3 = jnp.pad(b3, ((0, 0), (0, n_pad - n_actions)))
    cdt = jnp.bfloat16 if use_bf16 else jnp.float32
    return {
        "w1": w1.astype(jnp.float32),          # layer 1 runs on the VPU in f32
        "w2": w2.astype(cdt),
        "w3": w3.astype(cdt),
        "b": jnp.concatenate([b1, b2, b3], axis=1).astype(jnp.float32),
        "n_obs": int(n_obs),
        "hidden": int(hidden),
        "n_actions": int(n_actions),
        "n_pad": int(n_pad),
    }


def dqn_forward(x, prepared, *, tile_b=None, return_actions=False):
    """x: (B, n_obs) float32. prepared: output of prepare_dqn_params.
    Returns q (B, n_actions) f32, optionally also greedy actions (B, 1) int32."""
    B, n_obs = x.shape
    hidden = prepared["hidden"]
    n_actions = prepared["n_actions"]
    n_pad = prepared["n_pad"]
    assert n_obs == prepared["n_obs"]

    num_cores = _num_tensorcores()
    if tile_b is None:
        if num_cores > 1 and B > 8:
            # v7x: split the batch across the two TensorCores.
            tile_b = _round_up(pl.cdiv(B, num_cores), 8)
        else:
            # v5e/v6e: a single grid step -- the kernel is step-overhead bound.
            tile_b = _round_up(B, 8)
    else:
        tile_b = min(_round_up(max(tile_b, 8), 8), _round_up(B, 8))

    grid = (pl.cdiv(B, tile_b),)
    want_core_parallel = num_cores > 1 and grid[0] == num_cores

    kernel = _make_dqn_kernel(n_obs, hidden, n_actions, n_pad)

    # Weights/biases: constant block index -> fetched once, VMEM-resident.
    resident = lambda shape: pl.BlockSpec(shape, lambda i: (0, 0))

    w_itemsize = jnp.dtype(prepared["w2"].dtype).itemsize
    flops = 2 * B * (n_obs * hidden + hidden * hidden + hidden * n_actions)
    bytes_accessed = int(
        B * n_obs * 4                                       # x (f32)
        + n_obs * hidden * 4                                # w1 (f32)
        + (hidden * hidden + hidden * n_pad) * w_itemsize   # w2, w3
        + (2 * hidden + n_pad) * 4                          # packed biases
        + B * n_actions * 4 + B * 4                         # q + actions
    )

    def run(semantics):
        return pl.pallas_call(
            kernel,
            out_shape=(
                jax.ShapeDtypeStruct((B, n_actions), jnp.float32),
                jax.ShapeDtypeStruct((B, 1), jnp.int32),
            ),
            grid=grid,
            in_specs=[
                pl.BlockSpec((tile_b, n_obs), lambda i: (i, 0)),  # x: batch-tiled
                resident((n_obs, hidden)),                         # w1 (f32)
                resident((hidden, hidden)),                        # w2
                resident((hidden, n_pad)),                         # w3 (padded)
                resident((1, 2 * hidden + n_pad)),                 # packed biases
            ],
            out_specs=(
                pl.BlockSpec((tile_b, n_actions), lambda i: (i, 0)),
                pl.BlockSpec((tile_b, 1), lambda i: (i, 0)),
            ),
            compiler_params=pltpu.CompilerParams(
                dimension_semantics=semantics,
                # VMEM: weights ~70 KB + a few MB of activations even at
                # tile_b ~ 4096 f32 -- far under the scoped default on
                # v5e/v6e/v7x, so no vmem_limit_bytes override is needed.
            ),
            cost_estimate=pl.CostEstimate(
                flops=flops, transcendentals=0, bytes_accessed=bytes_accessed),
        )(x, prepared["w1"], prepared["w2"], prepared["w3"], prepared["b"])

    if want_core_parallel:
        try:
            q, act = run((pltpu.CORE_PARALLEL,))   # shard batch across the 2 TCs
        except Exception:
            q, act = run((pltpu.PARALLEL,))        # safe fallback
    else:
        q, act = run((pltpu.ARBITRARY,))

    if return_actions:
        return q, act
    return q


def init_dqn_params(key, n_obs, n_actions, hidden=128):
    """PyTorch nn.Linear-style init (uniform +-1/sqrt(fan_in)). Weights stored
    transposed as (in, out); biases as (1, out)."""
    def linear(k, fan_in, fan_out):
        kw, kb = jax.random.split(k)
        bound = 1.0 / jnp.sqrt(fan_in)
        w = jax.random.uniform(kw, (fan_in, fan_out), jnp.float32, -bound, bound)
        b = jax.random.uniform(kb, (1, fan_out), jnp.float32, -bound, bound)
        return w, b

    k1, k2, k3 = jax.random.split(key, 3)
    w1, b1 = linear(k1, n_obs, hidden)
    w2, b2 = linear(k2, hidden, hidden)
    w3, b3 = linear(k3, hidden, n_actions)
    return {"w1": w1, "b1": b1, "w2": w2, "b2": b2, "w3": w3, "b3": b3}


def dqn_reference(x, p):
    h1 = jnp.maximum(x @ p["w1"] + p["b1"], 0.0)
    h2 = jnp.maximum(h1 @ p["w2"] + p["b2"], 0.0)
    return h2 @ p["w3"] + p["b3"]


if __name__ == "__main__":
    # TODO(synk): only DQN.forward (+ greedy action selection) is a kernel;
    # the gym env, replay buffer and optimizer/training loop stay in host code.
    key = jax.random.PRNGKey(0)
    k_params, k_small, k_big, k_odd = jax.random.split(key, 4)
    n_obs, n_actions = 4, 2   # CartPole-like

    params = init_dqn_params(k_params, n_obs, n_actions)
    prep_f32 = prepare_dqn_params(params, use_bf16=False)   # tight-tolerance path
    prep_bf16 = prepare_dqn_params(params)                  # default bf16 path

    # 1) Acting path: tiny batch, fused greedy-action output.
    x_small = jax.random.normal(k_small, (2, n_obs), jnp.float32)
    q_small, a_small = dqn_forward(x_small, prep_f32, return_actions=True)
    q_small, a_small = jax.block_until_ready((q_small, a_small))
    ref_small = dqn_reference(x_small, params)
    assert q_small.shape == (2, n_actions) and a_small.shape == (2, 1)
    assert jnp.allclose(q_small, ref_small, atol=1e-5, rtol=1e-5), "f32 small mismatch"
    assert jnp.array_equal(a_small[:, 0], jnp.argmax(q_small, axis=1)), "action mismatch"

    # 2) Replay minibatch: one grid step on v5e/v6e, 2-way core split on v7x.
    x_big = jax.random.normal(k_big, (512, n_obs), jnp.float32)
    q_big = jax.block_until_ready(dqn_forward(x_big, prep_f32))
    ref_big = dqn_reference(x_big, params)
    assert q_big.shape == (512, n_actions)
    assert jnp.allclose(q_big, ref_big, atol=1e-4, rtol=1e-4), "f32 batch mismatch"

    # 3) Batch not divisible by the tile (partial last block + multi-step grid).
    x_odd = jax.random.normal(k_odd, (37, n_obs), jnp.float32)
    q_odd = jax.block_until_ready(dqn_forward(x_odd, prep_f32, tile_b=16))
    assert jnp.allclose(q_odd, dqn_reference(x_odd, params), atol=1e-4, rtol=1e-4), \
        "partial-tile mismatch"

    # 4) Default bf16 weights/activations (f32 accumulation): loose tolerance.
    q_bf16 = jax.block_until_ready(dqn_forward(x_big, prep_bf16))
    assert jnp.allclose(q_bf16, ref_big, atol=3e-2, rtol=3e-2), "bf16 mismatch"

    print("KERNEL_OK")
</pallas_src>

<mosaic_0001>
module attributes {stable_mosaic.version = 11 : i64} {
  func.func @kernel(%arg0: i32, %arg1: memref<8x4xf32, #tpu.memory_space<vmem>>, %arg2: memref<4x128xf32, #tpu.memory_space<vmem>>, %arg3: memref<128x128xf32, #tpu.memory_space<vmem>>, %arg4: memref<128x128xf32, #tpu.memory_space<vmem>>, %arg5: memref<1x384xf32, #tpu.memory_space<vmem>>, %arg6: memref<8x2xf32, #tpu.memory_space<vmem>>, %arg7: memref<8x1xi32, #tpu.memory_space<vmem>>) attributes {dimension_semantics = [#tpu.dimension_semantics<arbitrary>], iteration_bounds = array<i64: 1>, scalar_prefetch = 0 : i64, scratch_operands = 0 : i64, tpu.core_type = #tpu.core_type<tc>, window_params = [{transform_indices = @transform_0, window_bounds = array<i64: 8, 4>}, {pipeline_mode = #tpu.pipeline_mode<synchronous>, transform_indices = @transform_1, window_bounds = array<i64: 4, 128>}, {pipeline_mode = #tpu.pipeline_mode<synchronous>, transform_indices = @transform_2, window_bounds = array<i64: 128, 128>}, {pipeline_mode = #tpu.pipeline_mode<synchronous>, transform_indices = @transform_3, window_bounds = array<i64: 128, 128>}, {pipeline_mode = #tpu.pipeline_mode<synchronous>, transform_indices = @transform_4, window_bounds = array<i64: 1, 384>}, {transform_indices = @transform_5, window_bounds = array<i64: 8, 2>}, {transform_indices = @transform_6, window_bounds = array<i64: 8, 1>}]} {
    %c0 = arith.constant 0 : index
    %c0_0 = arith.constant 0 : index
    %0 = vector.load %arg5[%c0, %c0_0] : memref<1x384xf32, #tpu.memory_space<vmem>>, vector<1x128xf32>
    %c0_1 = arith.constant 0 : index
    %c128 = arith.constant 128 : index
    %1 = vector.load %arg5[%c0_1, %c128] : memref<1x384xf32, #tpu.memory_space<vmem>>, vector<1x128xf32>
    %c0_2 = arith.constant 0 : index
    %c256 = arith.constant 256 : index
    %2 = vector.load %arg5[%c0_2, %c256] : memref<1x384xf32, #tpu.memory_space<vmem>>, vector<1x128xf32>
    %c0_3 = arith.constant 0 : index
    %c0_4 = arith.constant 0 : index
    %3 = vector.load %arg1[%c0_3, %c0_4] : memref<8x4xf32, #tpu.memory_space<vmem>>, vector<8x4xf32>
    %c0_5 = arith.constant 0 : index
    %c0_6 = arith.constant 0 : index
    %4 = vector.load %arg2[%c0_5, %c0_6] : memref<4x128xf32, #tpu.memory_space<vmem>>, vector<4x128xf32>
    %5 = vector.extract_strided_slice %3 {offsets = [0, 0], sizes = [8, 1], strides = [1, 1]} : vector<8x4xf32> to vector<8x1xf32>
    %6 = vector.extract_strided_slice %4 {offsets = [0, 0], sizes = [1, 128], strides = [1, 1]} : vector<4x128xf32> to vector<1x128xf32>
    %7 = vector.broadcast %5 : vector<8x1xf32> to vector<8x128xf32>
    %8 = vector.broadcast %6 : vector<1x128xf32> to vector<8x128xf32>
    %9 = arith.mulf %7, %8 : vector<8x128xf32>
    %10 = vector.extract_strided_slice %3 {offsets = [0, 1], sizes = [8, 1], strides = [1, 1]} : vector<8x4xf32> to vector<8x1xf32>
    %11 = vector.extract_strided_slice %4 {offsets = [1, 0], sizes = [1, 128], strides = [1, 1]} : vector<4x128xf32> to vector<1x128xf32>
    %12 = vector.broadcast %10 : vector<8x1xf32> to vector<8x128xf32>
    %13 = vector.broadcast %11 : vector<1x128xf32> to vector<8x128xf32>
    %14 = arith.mulf %12, %13 : vector<8x128xf32>
    %15 = arith.addf %9, %14 : vector<8x128xf32>
    %16 = vector.extract_strided_slice %3 {offsets = [0, 2], sizes = [8, 1], strides = [1, 1]} : vector<8x4xf32> to vector<8x1xf32>
    %17 = vector.extract_strided_slice %4 {offsets = [2, 0], sizes = [1, 128], strides = [1, 1]} : vector<4x128xf32> to vector<1x128xf32>
    %18 = vector.broadcast %16 : vector<8x1xf32> to vector<8x128xf32>
    %19 = vector.broadcast %17 : vector<1x128xf32> to vector<8x128xf32>
    %20 = arith.mulf %18, %19 : vector<8x128xf32>
    %21 = arith.addf %15, %20 : vector<8x128xf32>
    %22 = vector.extract_strided_slice %3 {offsets = [0, 3], sizes = [8, 1], strides = [1, 1]} : vector<8x4xf32> to vector<8x1xf32>
    %23 = vector.extract_strided_slice %4 {offsets = [3, 0], sizes = [1, 128], strides = [1, 1]} : vector<4x128xf32> to vector<1x128xf32>
    %24 = vector.broadcast %22 : vector<8x1xf32> to vector<8x128xf32>
    %25 = vector.broadcast %23 : vector<1x128xf32> to vector<8x128xf32>
    %26 = arith.mulf %24, %25 : vector<8x128xf32>
    %27 = arith.addf %21, %26 : vector<8x128xf32>
    %28 = vector.broadcast %0 : vector<1x128xf32> to vector<8x128xf32>
    %29 = arith.addf %27, %28 : vector<8x128xf32>
    %cst = arith.constant 0.000000e+00 : f32
    %30 = vector.broadcast %cst : f32 to vector<8x128xf32>
    %31 = arith.maximumf %29, %30 : vector<8x128xf32>
    %c0_7 = arith.constant 0 : index
    %c0_8 = arith.constant 0 : index
    %32 = vector.load %arg3[%c0_7, %c0_8] : memref<128x128xf32, #tpu.memory_space<vmem>>, vector<128x128xf32>
    %cst_9 = arith.constant dense<0.000000e+00> : vector<8x128xf32>
    %33 = tpu.matmul %31, %32, %cst_9 {dimension_numbers = #tpu.dot_dimension_numbers<[1], [0], [0], [1], [0, 0, 1, 1], [], []>} : vector<8x128xf32>, vector<128x128xf32>, vector<8x128xf32> -> vector<8x128xf32>
    %34 = vector.broadcast %1 : vector<1x128xf32> to vector<8x128xf32>
    %35 = arith.addf %33, %34 : vector<8x128xf32>
    %cst_10 = arith.constant 0.000000e+00 : f32
    %36 = vector.broadcast %cst_10 : f32 to vector<8x128xf32>
    %37 = arith.maximumf %35, %36 : vector<8x128xf32>
    %c0_11 = arith.constant 0 : index
    %c0_12 = arith.constant 0 : index
    %38 = vector.load %arg4[%c0_11, %c0_12] : memref<128x128xf32, #tpu.memory_space<vmem>>, vector<128x128xf32>
    %cst_13 = arith.constant dense<0.000000e+00> : vector<8x128xf32>
    %39 = tpu.matmul %37, %38, %cst_13 {dimension_numbers = #tpu.dot_dimension_numbers<[1], [0], [0], [1], [0, 0, 1, 1], [], []>} : vector<8x128xf32>, vector<128x128xf32>, vector<8x128xf32> -> vector<8x128xf32>
    %40 = vector.broadcast %2 : vector<1x128xf32> to vector<8x128xf32>
    %41 = arith.addf %39, %40 : vector<8x128xf32>
    %42 = vector.extract_strided_slice %41 {offsets = [0, 0], sizes = [8, 2], strides = [1, 1]} : vector<8x128xf32> to vector<8x2xf32>
    %c0_14 = arith.constant 0 : index
    %c0_15 = arith.constant 0 : index
    %43 = vector.load %arg6[%c0_14, %c0_15] : memref<8x2xf32, #tpu.memory_space<vmem>>, vector<8x2xf32>
    tpu.vector_store %arg6[%c0_14, %c0_15], %42 {strides = array<i32>} : memref<8x2xf32, #tpu.memory_space<vmem>>, vector<8x2xf32>,
    %44 = tpu.iota {dimensions = array<i32: 1>} : vector<8x128xi32>
    %c2_i32 = arith.constant 2 : i32
    %45 = vector.broadcast %c2_i32 : i32 to vector<8x128xi32>
    %46 = arith.cmpi slt, %44, %45 : vector<8x128xi32>
    %cst_16 = arith.constant 0xFF800000 : f32
    %47 = vector.broadcast %cst_16 : f32 to vector<8x128xf32>
    %48 = arith.select %46, %41, %47 : vector<8x128xi1>, vector<8x128xf32>
    %cst_17 = arith.constant dense<0xFF800000> : vector<8xf32>
    %49 = vector.multi_reduction <maximumf>, %48, %cst_17 [1] : vector<8x128xf32> to vector<8xf32>
    %50 = vector.shape_cast %49 : vector<8xf32> to vector<8x1xf32>
    %51 = vector.broadcast %50 : vector<8x1xf32> to vector<8x128xf32>
    %52 = arith.cmpf oeq, %48, %51 : vector<8x128xf32>
    %c128_i32 = arith.constant 128 : i32
    %53 = vector.broadcast %c128_i32 : i32 to vector<8x128xi32>
    %54 = arith.select %52, %44, %53 : vector<8x128xi1>, vector<8x128xi32>
    %cst_18 = arith.constant dense<2147483647> : vector<8xi32>
    %55 = vector.multi_reduction <minsi>, %54, %cst_18 [1] : vector<8x128xi32> to vector<8xi32>
    %56 = vector.shape_cast %55 : vector<8xi32> to vector<8x1xi32>
    %c0_19 = arith.constant 0 : index
    %c0_20 = arith.constant 0 : index
    %57 = vector.load %arg7[%c0_19, %c0_20] : memref<8x1xi32, #tpu.memory_space<vmem>>, vector<8x1xi32>
    tpu.vector_store %arg7[%c0_19, %c0_20], %56 {strides = array<i32>} : memref<8x1xi32, #tpu.memory_space<vmem>>, vector<8x1xi32>,
    return
  }
  func.func @transform_0(%arg0: i32) -> (i32, i32) {
    %c0_i32 = arith.constant 0 : i32
    %c0_i32_0 = arith.constant 0 : i32
    return %arg0, %c0_i32 : i32, i32
  }
  func.func @transform_1(%arg0: i32) -> (i32, i32) {
    %c0_i32 = arith.constant 0 : i32
    %c0_i32_0 = arith.constant 0 : i32
    %c0_i32_1 = arith.constant 0 : i32
    return %c0_i32, %c0_i32_0 : i32, i32
  }
  func.func @transform_2(%arg0: i32) -> (i32, i32) {
    %c0_i32 = arith.constant 0 : i32
    %c0_i32_0 = arith.constant 0 : i32
    %c0_i32_1 = arith.constant 0 : i32
    return %c0_i32, %c0_i32_0 : i32, i32
  }
  func.func @transform_3(%arg0: i32) -> (i32, i32) {
    %c0_i32 = arith.constant 0 : i32
    %c0_i32_0 = arith.constant 0 : i32
    %c0_i32_1 = arith.constant 0 : i32
    return %c0_i32, %c0_i32_0 : i32, i32
  }
  func.func @transform_4(%arg0: i32) -> (i32, i32) {
    %c0_i32 = arith.constant 0 : i32
    %c0_i32_0 = arith.constant 0 : i32
    %c0_i32_1 = arith.constant 0 : i32
    return %c0_i32, %c0_i32_0 : i32, i32
  }
  func.func @transform_5(%arg0: i32) -> (i32, i32) {
    %c0_i32 = arith.constant 0 : i32
    %c0_i32_0 = arith.constant 0 : i32
    return %arg0, %c0_i32 : i32, i32
  }
  func.func @transform_6(%arg0: i32) -> (i32, i32) {
    %c0_i32 = arith.constant 0 : i32
    %c0_i32_0 = arith.constant 0 : i32
    return %arg0, %c0_i32 : i32, i32
  }
}

</mosaic_0001>

<llo_original>
// kernel: tpu_custom_call.1
$region0: #{tpu_custom_call.1}
  #allocation0 [shape = 'u32[]', space=smem, size = 0x4, offset = 0x4, fixed_abs, tag = 'smem constant byte address 0x4 - core index']
  #allocation1 [shape = 'u32[144,128]{1,0:T(1,128)}', space=vmem, size = 0x12000, scoped, tag = 'internal scratch']
  %s0 = inlined_call_operand.hbm [shape: f32[2,4], index: 0, kind: input, shape index: {}]
  %s1 = inlined_call_operand.hbm [shape: f32[4,128], index: 1, kind: input, shape index: {}]
  %s2 = inlined_call_operand.hbm [shape: f32[128,128], index: 2, kind: input, shape index: {}]
  %s3 = inlined_call_operand.hbm [shape: f32[128,128], index: 3, kind: input, shape index: {}]
  %s4 = inlined_call_operand.vmem [shape: f32[1,384], index: 4, kind: input, shape index: {}]
  %s5 = inlined_call_operand.hbm [shape: f32[2,2], index: 5, kind: output, shape index: {0}]
  %s6 = inlined_call_operand.vmem [shape: s32[2,1], index: 6, kind: output, shape index: {1}]
  %7 = xla_tuple %s5, %s6
  %s8 = sld [smem:[#allocation0]]
  $region84: #{tpu_custom_call.1} parent=0
    _
  %s10 = ssub.s32 1, %s8
  %s11 = scalar_select 0, %s10, %s8
  $region1: #{tpu_custom_call.1} parent=0
    #allocation2 [shape = 'u8[4096]{0}', space=vmem, size = 0x1000, scoped, tag = 'input window, operand 0, single buffered']
    #allocation3 [shape = 's32[1]{0}', space=sflag, size = 0x4, scoped, tag = 'scoped memory for tpu_custom_call.1']
    #allocation4 [shape = 's32[1]{0}', space=sflag, size = 0x4, scoped, tag = 'scoped memory for tpu_custom_call.1']
    #allocation5 [shape = 'u8[2048]{0}', space=vmem, size = 0x800, scoped, tag = 'input window, operand 1, single buffered']
    #allocation6 [shape = 's32[1]{0}', space=sflag, size = 0x4, scoped, tag = 'scoped memory for tpu_custom_call.1']
    #allocation7 [shape = 'u8[65536]{0}', space=vmem, size = 0x10000, scoped, tag = 'input window, operand 2, single buffered']
    #allocation8 [shape = 'u8[65536]{0}', space=vmem, size = 0x10000, scoped, tag = 'input window, operand 3, single buffered']
    #allocation9 [shape = 's32[1]{0}', space=sflag, size = 0x4, scoped, tag = 'scoped memory for tpu_custom_call.1']
    #allocation10 [shape = 'u8[4096]{0}', space=vmem, size = 0x1000, scoped, tag = 'output window, operand 0, single buffered']
    #allocation11 [shape = 'u8[4096]{0}', space=vmem, size = 0x1000, scoped, tag = 'output window, operand 1, single buffered']
    %12 = vsyncpa [#allocation3], 0
    %13 = vsyncpa [#allocation6], 0
    %14 = vsyncpa [#allocation9], 0
    %15 = vsyncpa [#allocation4], 0
    // Predicated region
    $region2: #{tpu_custom_call.1} parent=1 // pred_check
      _
    $region3: #{tpu_custom_call.1} parent=1 // pred_check_branch
      %17 = sbr.rel (0) target = $region5
    $region4: #{tpu_custom_call.1} parent=1 // pred_region
      %s19 = ssub.s32 128, 32
      %20 = vsyncadd [#allocation3], %s19
      %s21 = sshll.u32 [#allocation2], 4
      %s22 = int_to_ptr.vmem [resolvable:$true] %s21
      %27 = dma.hbm_to_vmem [thread:$0]  %s0, 32, %s22, [#allocation3], 32, 32, 2
    $region5: #{tpu_custom_call.1} parent=1 // pred_fallthru
      _
    // Predicated region
    $region6: #{tpu_custom_call.1} parent=1 // pred_check
      _
    $region7: #{tpu_custom_call.1} parent=1 // pred_check_branch
      %29 = sbr.rel (0) target = $region9
    $region8: #{tpu_custom_call.1} parent=1 // pred_region
      %s31 = ssub.s32 64, 64
      %32 = vsyncadd [#allocation6], %s31
      %s34 = sshll.u32 [#allocation5], 4
      %s35 = int_to_ptr.vmem [resolvable:$true] %s34
      %37 = dma.hbm_to_vmem [thread:$0]  %s1, 64, %s35, [#allocation6]
    $region9: #{tpu_custom_call.1} parent=1 // pred_fallthru
      _
    // Predicated region
    $region10: #{tpu_custom_call.1} parent=1 // pred_check
      _
    $region11: #{tpu_custom_call.1} parent=1 // pred_check_branch
      %39 = sbr.rel (0) target = $region13
    $region12: #{tpu_custom_call.1} parent=1 // pred_region
      %s41 = ssub.s32 2048, 2048
      %42 = vsyncadd [#allocation6], %s41
      %s43 = sshll.u32 [#allocation7], 4
      %s44 = int_to_ptr.vmem [resolvable:$true] %s43
      %49 = dma.hbm_to_vmem [thread:$0]  %s2, 2048, %s44, [#allocation6], 128, 128, 8
    $region13: #{tpu_custom_call.1} parent=1 // pred_fallthru
      _
    // Predicated region
    $region14: #{tpu_custom_call.1} parent=1 // pred_check
      _
    $region15: #{tpu_custom_call.1} parent=1 // pred_check_branch
      %51 = sbr.rel (0) target = $region17
    $region16: #{tpu_custom_call.1} parent=1 // pred_region
      %s53 = ssub.s32 2048, 2048
      %54 = vsyncadd [#allocation9], %s53
      %s55 = sshll.u32 [#allocation8], 4
      %s56 = int_to_ptr.vmem [resolvable:$true] %s55
      %61 = dma.hbm_to_vmem [thread:$0]  %s3, 2048, %s56, [#allocation9], 128, 128, 8
    $region17: #{tpu_custom_call.1} parent=1 // pred_fallthru
      _
    // Predicated region
    $region18: #{tpu_custom_call.1} parent=1 // pred_check
      _
    $region19: #{tpu_custom_call.1} parent=1 // pred_check_branch
      %63 = sbr.rel (0) target = $region21
    $region20: #{tpu_custom_call.1} parent=1 // pred_region
      _
    $region21: #{tpu_custom_call.1} parent=1 // pred_fallthru
      _
    // Predicated region
    $region22: #{tpu_custom_call.1} parent=1 // pred_check
      _
    $region23: #{tpu_custom_call.1} parent=1 // pred_check_branch
      %65 = sbr.rel (0) target = $region25
    $region24: #{tpu_custom_call.1} parent=1 // pred_region
      %66 = dma.done [#allocation3], 128
    $region25: #{tpu_custom_call.1} parent=1 // pred_fallthru
      _
    // Predicated region
    $region26: #{tpu_custom_call.1} parent=1 // pred_check
      _
    $region27: #{tpu_custom_call.1} parent=1 // pred_check_branch
      %68 = sbr.rel (0) target = $region29
    $region28: #{tpu_custom_call.1} parent=1 // pred_region
      %69 = dma.done [#allocation6], 64
    $region29: #{tpu_custom_call.1} parent=1 // pred_fallthru
      _
    // Predicated region
    $region30: #{tpu_custom_call.1} parent=1 // pred_check
      _
    $region31: #{tpu_custom_call.1} parent=1 // pred_check_branch
      %71 = sbr.rel (0) target = $region33
    $region32: #{tpu_custom_call.1} parent=1 // pred_region
      %72 = dma.done [#allocation6], 2048
    $region33: #{tpu_custom_call.1} parent=1 // pred_fallthru
      _
    // Predicated region
    $region34: #{tpu_custom_call.1} parent=1 // pred_check
      _
    $region35: #{tpu_custom_call.1} parent=1 // pred_check_branch
      %74 = sbr.rel (0) target = $region37
    $region36: #{tpu_custom_call.1} parent=1 // pred_region
      %75 = dma.done [#allocation9], 2048
    $region37: #{tpu_custom_call.1} parent=1 // pred_fallthru
      _
    %v76 = vld [vmem:[%s4] sm:$0x1]
    %v77 = vld [vmem:[%s4 + $0x1] sm:$0x1]
    %v78 = vld [vmem:[%s4 + $0x2] sm:$0x1]
    %v79 = vld [vmem:[#allocation2] sm:$0xff]
    %v80 = vld [vmem:[#allocation5] sm:$0xf]
    %82 = vset.pattern.permute.xlu0 0
    %83 = vperm.xlu0 %82, %v79
    %v84 = vpop.permute.xlu0 %83
    %v86 = vlaneseq
    %v87 = vshrl.u32 %v86, 7
    %v88 = vsub.s32 0, %v87
    %v89 = vrot.slane %v80, %v88
    %v90 = vmul.f32 %v84, %v89
    %91 = vset.pattern.permute.xlu0 1
    %92 = vperm.xlu0 %91, %v79
    %v93 = vpop.permute.xlu0 %92
    %v95 = vlaneseq
    %v96 = vshrl.u32 %v95, 7
    %v97 = vsub.s32 1, %v96
    %v98 = vrot.slane %v80, %v97
    %v99 = vmul.f32 %v93, %v98
    %v100 = vadd.f32 %v90, %v99
    %101 = vset.pattern.permute.xlu0 2
    %102 = vperm.xlu0 %101, %v79
    %v103 = vpop.permute.xlu0 %102
    %v105 = vlaneseq
    %v106 = vshrl.u32 %v105, 7
    %v107 = vsub.s32 2, %v106
    %v108 = vrot.slane %v80, %v107
    %v109 = vmul.f32 %v103, %v108
    %v110 = vadd.f32 %v100, %v109
    %111 = vset.pattern.permute.xlu0 3
    %112 = vperm.xlu0 %111, %v79
    %v113 = vpop.permute.xlu0 %112
    %v115 = vlaneseq
    %v116 = vshrl.u32 %v115, 7
    %v117 = vsub.s32 3, %v116
    %v118 = vrot.slane %v80, %v117
    %v119 = vmul.f32 %v113, %v118
    %v120 = vadd.f32 %v110, %v119
    %v122 = vlaneseq
    %v123 = vshrl.u32 %v122, 7
    %v124 = vsub.s32 0, %v123
    %v125 = vrot.slane %v76, %v124
    %v127 = vadd.f32 %v120, %v125
    %v128 = vmax.f32 %v127, 0.0
    %v129 = vld [vmem:[#allocation7] sm:$0xff]
    %v130 = vld [vmem:[#allocation7 + $0x8] sm:$0xff]
    %v131 = vld [vmem:[#allocation7 + $0x10] sm:$0xff]
    %v132 = vld [vmem:[#allocation7 + $0x18] sm:$0xff]
    %v133 = vld [vmem:[#allocation7 + $0x20] sm:$0xff]
    %v134 = vld [vmem:[#allocation7 + $0x28] sm:$0xff]
    %v135 = vld [vmem:[#allocation7 + $0x30] sm:$0xff]
    %v136 = vld [vmem:[#allocation7 + $0x38] sm:$0xff]
    %v137 = vld [vmem:[#allocation7 + $0x40] sm:$0xff]
    %v138 = vld [vmem:[#allocation7 + $0x48] sm:$0xff]
    %v139 = vld [vmem:[#allocation7 + $0x50] sm:$0xff]
    %v140 = vld [vmem:[#allocation7 + $0x58] sm:$0xff]
    %v141 = vld [vmem:[#allocation7 + $0x60] sm:$0xff]
    %v142 = vld [vmem:[#allocation7 + $0x68] sm:$0xff]
    %v143 = vld [vmem:[#allocation7 + $0x70] sm:$0xff]
    %v144 = vld [vmem:[#allocation7 + $0x78] sm:$0xff]
    %v146 = vlaneseq
    %v147 = vshrl.u32 %v146, 7
    %v148 = vsub.s32 0, %v147
    %v149 = vrot.slane %v77, %v148
    %151 = vmatprep.subr.mxu0 0.0
    %152 = vmatpush1.msra.mxu0 %v129
    %153 = vmatprep.subr.mxu0 0.0
    %154 = vmatpush1.msra.mxu0 %v130
    %155 = vmatprep.subr.mxu0 0.0
    %156 = vmatpush1.msra.mxu0 %v131
    %157 = vmatprep.subr.mxu0 0.0
    %158 = vmatpush1.msra.mxu0 %v132
    %159 = vmatprep.subr.mxu0 0.0
    %160 = vmatpush1.msra.mxu0 %v133
    %161 = vmatprep.subr.mxu0 0.0
    %162 = vmatpush1.msra.mxu0 %v134
    %163 = vmatprep.subr.mxu0 0.0
    %164 = vmatpush1.msra.mxu0 %v135
    %165 = vmatprep.subr.mxu0 0.0
    %166 = vmatpush1.msra.mxu0 %v136
    %167 = vmatprep.subr.mxu0 0.0
    %168 = vmatpush1.msra.mxu0 %v137
    %169 = vmatprep.subr.mxu0 0.0
    %170 = vmatpush1.msra.mxu0 %v138
    %171 = vmatprep.subr.mxu0 0.0
    %172 = vmatpush1.msra.mxu0 %v139
    %173 = vmatprep.subr.mxu0 0.0
    %174 = vmatpush1.msra.mxu0 %v140
    %175 = vmatprep.subr.mxu0 0.0
    %176 = vmatpush1.msra.mxu0 %v141
    %177 = vmatprep.subr.mxu0 0.0
    %178 = vmatpush1.msra.mxu0 %v142
    %179 = vmatprep.subr.mxu0 0.0
    %180 = vmatpush1.msra.mxu0 %v143
    %181 = vmatprep.subr.mxu0 0.0
    %182 = vmatpush1.msra.mxu0 %v144
    %183 = vmatprep.subr.mxu0 0.0
    %184 = vmatpush1.msra.mxu0 0.0
    %185 = vmatprep.subr.mxu0 0.0
    %186 = vmatpush1.msra.mxu0 0.0
    %187 = vmatprep.subr.mxu0 0.0
    %188 = vmatpush1.msra.mxu0 0.0
    %189 = vmatprep.subr.mxu0 0.0
    %190 = vmatpush1.msra.mxu0 0.0
    %191 = vmatprep.subr.mxu0 0.0
    %192 = vmatpush1.msra.mxu0 0.0
    %193 = vmatprep.subr.mxu0 0.0
    %194 = vmatpush1.msra.mxu0 0.0
    %195 = vmatprep.subr.mxu0 0.0
    %196 = vmatpush1.msra.mxu0 0.0
    %197 = vmatprep.subr.mxu0 0.0
    %198 = vmatpush1.msra.mxu0 0.0
    %199 = vmatprep.subr.mxu0 0.0
    %200 = vmatpush1.msra.mxu0 0.0
    %201 = vmatprep.subr.mxu0 0.0
    %202 = vmatpush1.msra.mxu0 0.0
    %203 = vmatprep.subr.mxu0 0.0
    %204 = vmatpush1.msra.mxu0 0.0
    %205 = vmatprep.subr.mxu0 0.0
    %206 = vmatpush1.msra.mxu0 0.0
    %207 = vmatprep.subr.mxu0 0.0
    %208 = vmatpush1.msra.mxu0 0.0
    %209 = vmatprep.subr.mxu0 0.0
    %210 = vmatpush1.msra.mxu0 0.0
    %211 = vmatprep.subr.mxu0 0.0
    %212 = vmatpush1.msra.mxu0 0.0
    %213 = vmatprep.subr.mxu0 0.0
    %214 = vmatpush1.msra.mxu0 0.0
    %215 = vmatprep.mubr.f32.mxu0 0.0
    %216 = vmatmul.mubr.f32.gmra.mrb[0].mxu0 %v128
    %v217 = vpop.f32.mrb[0].mxu0
    %v218 = vadd.f32 %v149, %v217
    %v219 = vpop.f32.mrb[0].mxu0
    %220 = vdwg.mxu0
    %v221 = vmax.f32 %v218, 0.0
    %v222 = vld [vmem:[#allocation8] sm:$0xff]
    %v223 = vld [vmem:[#allocation8 + $0x8] sm:$0xff]
    %v224 = vld [vmem:[#allocation8 + $0x10] sm:$0xff]
    %v225 = vld [vmem:[#allocation8 + $0x18] sm:$0xff]
    %v226 = vld [vmem:[#allocation8 + $0x20] sm:$0xff]
    %v227 = vld [vmem:[#allocation8 + $0x28] sm:$0xff]
    %v228 = vld [vmem:[#allocation8 + $0x30] sm:$0xff]
    %v229 = vld [vmem:[#allocation8 + $0x38] sm:$0xff]
    %v230 = vld [vmem:[#allocation8 + $0x40] sm:$0xff]
    %v231 = vld [vmem:[#allocation8 + $0x48] sm:$0xff]
    %v232 = vld [vmem:[#allocation8 + $0x50] sm:$0xff]
    %v233 = vld [vmem:[#allocation8 + $0x58] sm:$0xff]
    %v234 = vld [vmem:[#allocation8 + $0x60] sm:$0xff]
    %v235 = vld [vmem:[#allocation8 + $0x68] sm:$0xff]
    %v236 = vld [vmem:[#allocation8 + $0x70] sm:$0xff]
    %v237 = vld [vmem:[#allocation8 + $0x78] sm:$0xff]
    %v239 = vlaneseq
    %v240 = vshrl.u32 %v239, 7
    %v241 = vsub.s32 0, %v240
    %v242 = vrot.slane %v78, %v241
    %244 = vmatprep.subr.mxu0 0.0
    %245 = vmatpush1.msra.mxu0 %v222
    %246 = vmatprep.subr.mxu0 0.0
    %247 = vmatpush1.msra.mxu0 %v223
    %248 = vmatprep.subr.mxu0 0.0
    %249 = vmatpush1.msra.mxu0 %v224
    %250 = vmatprep.subr.mxu0 0.0
    %251 = vmatpush1.msra.mxu0 %v225
    %252 = vmatprep.subr.mxu0 0.0
    %253 = vmatpush1.msra.mxu0 %v226
    %254 = vmatprep.subr.mxu0 0.0
    %255 = vmatpush1.msra.mxu0 %v227
    %256 = vmatprep.subr.mxu0 0.0
    %257 = vmatpush1.msra.mxu0 %v228
    %258 = vmatprep.subr.mxu0 0.0
    %259 = vmatpush1.msra.mxu0 %v229
    %260 = vmatprep.subr.mxu0 0.0
    %261 = vmatpush1.msra.mxu0 %v230
    %262 = vmatprep.subr.mxu0 0.0
    %263 = vmatpush1.msra.mxu0 %v231
    %264 = vmatprep.subr.mxu0 0.0
    %265 = vmatpush1.msra.mxu0 %v232
    %266 = vmatprep.subr.mxu0 0.0
    %267 = vmatpush1.msra.mxu0 %v233
    %268 = vmatprep.subr.mxu0 0.0
    %269 = vmatpush1.msra.mxu0 %v234
    %270 = vmatprep.subr.mxu0 0.0
    %271 = vmatpush1.msra.mxu0 %v235
    %272 = vmatprep.subr.mxu0 0.0
    %273 = vmatpush1.msra.mxu0 %v236
    %274 = vmatprep.subr.mxu0 0.0
    %275 = vmatpush1.msra.mxu0 %v237
    %276 = vmatprep.subr.mxu0 0.0
    %277 = vmatpush1.msra.mxu0 0.0
    %278 = vmatprep.subr.mxu0 0.0
    %279 = vmatpush1.msra.mxu0 0.0
    %280 = vmatprep.subr.mxu0 0.0
    %281 = vmatpush1.msra.mxu0 0.0
    %282 = vmatprep.subr.mxu0 0.0
    %283 = vmatpush1.msra.mxu0 0.0
    %284 = vmatprep.subr.mxu0 0.0
    %285 = vmatpush1.msra.mxu0 0.0
    %286 = vmatprep.subr.mxu0 0.0
    %287 = vmatpush1.msra.mxu0 0.0
    %288 = vmatprep.subr.mxu0 0.0
    %289 = vmatpush1.msra.mxu0 0.0
    %290 = vmatprep.subr.mxu0 0.0
    %291 = vmatpush1.msra.mxu0 0.0
    %292 = vmatprep.subr.mxu0 0.0
    %293 = vmatpush1.msra.mxu0 0.0
    %294 = vmatprep.subr.mxu0 0.0
    %295 = vmatpush1.msra.mxu0 0.0
    %296 = vmatprep.subr.mxu0 0.0
    %297 = vmatpush1.msra.mxu0 0.0
    %298 = vmatprep.subr.mxu0 0.0
    %299 = vmatpush1.msra.mxu0 0.0
    %300 = vmatprep.subr.mxu0 0.0
    %301 = vmatpush1.msra.mxu0 0.0
    %302 = vmatprep.subr.mxu0 0.0
    %303 = vmatpush1.msra.mxu0 0.0
    %304 = vmatprep.subr.mxu0 0.0
    %305 = vmatpush1.msra.mxu0 0.0
    %306 = vmatprep.subr.mxu0 0.0
    %307 = vmatpush1.msra.mxu0 0.0
    %308 = vmatprep.mubr.f32.mxu0 0.0
    %309 = vmatmul.mubr.f32.gmra.mrb[0].mxu0 %v221
    %v310 = vpop.f32.mrb[0].mxu0
    %v311 = vadd.f32 %v242, %v310
    %v312 = vpop.f32.mrb[0].mxu0
    %313 = vdwg.mxu0
    %vm314 = vcmask 15360
    %315 = vst.msk [vmem:[#allocation10] sm:$0xff] %vm314, %v311
    %v316 = vlaneseq
    %v317 = vand.u32 %v316, 127
    %vm318 = vcmp.lt.s32.totalorder %v317, 2
    %v319 = vsel %vm318, %v311, -inf
    %320 = vmax.xlane.f32.xlu0 %v319
    %v321 = vpop.xlane.xlu0 %320
    %vm322 = vcmp.eq.f32.partialorder %v319, %v321
    %v323 = vsel %vm322, %v317, 128
    %v324 = vand.u32 %v323, 65535
    %v325 = vshra.s32 %v323, 16
    %v326 = vcvt.s32.f32 %v324
    %v327 = vcvt.s32.f32 %v325
    %328 = vmin.xlane.f32.xlu0 %v327
    %v329 = vpop.xlane.xlu0 %328
    %vm330 = vcmp.eq.f32.partialorder %v327, %v329
    %v331 = vsel %vm330, %v326, inf
    %332 = vmin.xlane.f32.xlu0 %v331
    %v333 = vpop.xlane.xlu0 %332
    %v334 = vcvt.f32.s32 %v333
    %v335 = vcvt.f32.s32 %v329
    %v336 = vshll.u32 %v335, 16
    %v337 = vadd.s32 %v336, %v334
    %vm338 = vcmask 7168
    %339 = vst.msk [vmem:[#allocation11] sm:$0xff] %vm338, %v337
    // Predicated region
    $region38: #{tpu_custom_call.1} parent=1 // pred_check
      _
    $region39: #{tpu_custom_call.1} parent=1 // pred_check_branch
      %341 = sbr.rel (0) target = $region41
    $region40: #{tpu_custom_call.1} parent=1 // pred_region
      %s343 = ssub.s32 128, 32
      %344 = vsyncadd [#allocation4], %s343
      %s345 = sshll.u32 [#allocation10], 4
      %s346 = int_to_ptr.vmem [resolvable:$true] %s345
      %351 = dma.vmem_to_hbm [thread:$0]  %s346, 32, %s5, [#allocation4], 32, 32, 2
    $region41: #{tpu_custom_call.1} parent=1 // pred_fallthru
      _
    // Predicated region
    $region42: #{tpu_custom_call.1} parent=1 // pred_check
      _
    $region43: #{tpu_custom_call.1} parent=1 // pred_check_branch
      %353 = sbr.rel (0) target = $region45
    $region44: #{tpu_custom_call.1} parent=1 // pred_region
      // Predicated region
      $region46: #{tpu_custom_call.1} parent=44 // pred_check
        _
      $region47: #{tpu_custom_call.1} parent=44 // pred_check_branch
        %355 = sbr.rel (0) target = $region49
      $region48: #{tpu_custom_call.1} parent=44 // pred_region
        // Predicated region
        $region50: #{tpu_custom_call.1} parent=48 // pred_check
          _
        $region51: #{tpu_custom_call.1} parent=48 // pred_check_branch
          %357 = sbr.rel target = $region53
        $region52: #{tpu_custom_call.1} parent=48 // pred_region
          // Predicated region
          $region65: #{tpu_custom_call.1} parent=52 // pred_check
            _
          $region66: #{tpu_custom_call.1} parent=52 // pred_check_branch
            %372 = sbr.rel (0) target = $region68
          $region67: #{tpu_custom_call.1} parent=52 // pred_region
            loop: start=0, step=1, limit=1
            $region69: #{tpu_custom_call.1} parent=67 // loop_pre_header
              _
            $region70: #{tpu_custom_call.1} parent=67 // loop_header
              %s375 = sphi 0, %s379
              %p376 = scmp.ge.s32.totalorder %s375, 1
              %s380 = sphi [#allocation11], [#allocation11]
              %s381 = sphi %s6, %s6
            $region71: #{tpu_custom_call.1} parent=67 // loop_header_branch
              %378 = sbr.rel (%p376) target = $region75
            $region72: #{tpu_custom_call.1} parent=67 // loop_body
              %v382 = vld [vmem:[%s380] sm:$0x3]
              %383 = vst [vmem:[%s381] sm:$0x3] %v382
            $region73: #{tpu_custom_call.1} parent=67 // loop_footer
              %s379 = sadd.s32 1, %s375
            $region74: #{tpu_custom_call.1} parent=67 // loop_footer_branch
              %374 = sbr.rel target = $region70
            $region75: #{tpu_custom_call.1} parent=67 // loop_exit
              _
          $region68: #{tpu_custom_call.1} parent=52 // pred_fallthru
            _
        $region53: #{tpu_custom_call.1} parent=48 // pred_fallthru
          _
        // Predicated region
        $region54: #{tpu_custom_call.1} parent=48 // pred_check
          _
        $region55: #{tpu_custom_call.1} parent=48 // pred_check_branch
          %359 = sbr.rel (0) target = $region57
        $region56: #{tpu_custom_call.1} parent=48 // pred_region
          loop: start=0, step=1, limit=1
          $region58: #{tpu_custom_call.1} parent=56 // loop_pre_header
            _
          $region59: #{tpu_custom_call.1} parent=56 // loop_header
            %s362 = sphi 0, %s366
            %p363 = scmp.ge.s32.totalorder %s362, 1
            %s367 = sphi [#allocation11], [#allocation11]
            %s368 = sphi %s6, %s6
          $region60: #{tpu_custom_call.1} parent=56 // loop_header_branch
            %365 = sbr.rel (%p363) target = $region64
          $region61: #{tpu_custom_call.1} parent=56 // loop_body
            %v369 = vld [vmem:[%s367] sm:$0x3]
            %370 = vst [vmem:[%s368] sm:$0x3] %v369
          $region62: #{tpu_custom_call.1} parent=56 // loop_footer
            %s366 = sadd.s32 1, %s362
          $region63: #{tpu_custom_call.1} parent=56 // loop_footer_branch
            %361 = sbr.rel target = $region59
          $region64: #{tpu_custom_call.1} parent=56 // loop_exit
            _
        $region57: #{tpu_custom_call.1} parent=48 // pred_fallthru
          _
      $region49: #{tpu_custom_call.1} parent=44 // pred_fallthru
        _
      %384 = vnop
    $region45: #{tpu_custom_call.1} parent=1 // pred_fallthru
      _
    // Predicated region
    $region76: #{tpu_custom_call.1} parent=1 // pred_check
      _
    $region77: #{tpu_custom_call.1} parent=1 // pred_check_branch
      %386 = sbr.rel (0) target = $region79
    $region78: #{tpu_custom_call.1} parent=1 // pred_region
      %387 = dma.done [#allocation4], 128
    $region79: #{tpu_custom_call.1} parent=1 // pred_fallthru
      _
    // Predicated region
    $region80: #{tpu_custom_call.1} parent=1 // pred_check
      _
    $region81: #{tpu_custom_call.1} parent=1 // pred_check_branch
      %389 = sbr.rel (0) target = $region83
    $region82: #{tpu_custom_call.1} parent=1 // pred_region
      _
    $region83: #{tpu_custom_call.1} parent=1 // pred_fallthru
      _
    %390 = vsyncpa [#allocation3], 1
    %391 = vsyncpa [#allocation6], 1
    %392 = vsyncpa [#allocation9], 1
    %393 = vsyncpa [#allocation4], 1

</llo_original>
